<compile_context>
chip_gen: v7x
topology: tpu7x:2x2x1
jax: 0.10.0
libtpu: 0.0.40
codegen_flags: <defaults>
</compile_context>

<pallas_src>
import jax
import jax.numpy as jnp
from jax.experimental import pallas as pl
from jax.experimental.pallas import tpu as pltpu


def recommendation_kernel(idx_ref, score_ref, b_ref, item_ref, wi_ref, out_ref):
    """Fused (folded) gather + concat-linear + sigmoid.

    idx_ref   : SMEM [B]    int32   -- user row indices
    score_ref : SMEM [U]    float32 -- precomputed user_table @ w_user
    b_ref     : SMEM [1]    float32 -- fc bias
    item_ref  : VMEM [B, D] float32 -- item embeddings
    wi_ref    : VMEM [1, D] float32 -- fc weight slice for the item half
    out_ref   : VMEM [B, 1] float32 -- sigmoid scores
    """
    B = item_ref.shape[0]

    # Item half of Linear(2D -> 1): VPU multiply + lane reduction.
    # (A [B,D]@[D,1] matmul would light up <1% of MXU output columns.)
    item_term = jnp.sum(item_ref[...] * wi_ref[...], axis=-1, keepdims=True)  # [B, 1]

    # User half: scalar gather of precomputed per-user scores from SMEM.
    # Exact fold: (one_hot @ table) @ w_user == score[idx].
    row_ids = jax.lax.broadcasted_iota(jnp.int32, (B, 1), dimension=0)
    user_term = jnp.zeros((B, 1), jnp.float32)
    for i in range(B):                      # B is small & static -> fully unrolled
        s = score_ref[idx_ref[i]]           # dynamic scalar SMEM load
        user_term = jnp.where(row_ids == i, s, user_term)

    # TODO(synk): if B is ever scaled up, emit a lane-dense [1, B_pad] output
    # (or a grid over B with dimension_semantics=("parallel",)) instead of a
    # [B, 1] column, to avoid masked vst.msk stores and to use both v7x TCs.
    out_ref[...] = jax.nn.sigmoid(item_term + user_term + b_ref[0])


def recommendation_forward(user_idx, user_table, item_emb, fc_weight, fc_bias):
    """Wrapper: folds the gather into a per-user score and calls the kernel.

    user_idx  : [B]      int32
    user_table: [U, D]   float32
    item_emb  : [B, D]   float32
    fc_weight : [1, 2*D] float32  (PyTorch nn.Linear layout)
    fc_bias   : [1]      float32
    """
    B, D = item_emb.shape
    U = user_table.shape[0]

    w = fc_weight.reshape(2 * D).astype(jnp.float32)
    # Algebraic fold (exact): gather(table, idx) @ w_user == gather(table @ w_user, idx)
    user_score = (user_table.astype(jnp.float32) @ w[:D])        # [U]
    w_item = w[D:].reshape(1, D)                                 # [1, D]

    idx = user_idx.astype(jnp.int32)                             # [B]
    bias = fc_bias.reshape(1).astype(jnp.float32)                # [1]

    smem = pl.BlockSpec(memory_space=pltpu.MemorySpace.SMEM)
    vmem = pl.BlockSpec(memory_space=pltpu.MemorySpace.VMEM)

    cost = pl.CostEstimate(
        flops=2 * B * D + 4 * B,             # item mul+reduce, adds
        transcendentals=B,                   # sigmoid
        bytes_accessed=4 * (B * D + D + U + 2 * B + 1),
    )

    return pl.pallas_call(
        recommendation_kernel,
        out_shape=jax.ShapeDtypeStruct((B, 1), jnp.float32),
        in_specs=[smem, smem, smem, vmem, vmem],
        out_specs=vmem,
        cost_estimate=cost,
    )(idx, user_score, bias, item_emb, w_item)


if __name__ == "__main__":
    embedding_dim = 32
    num_users = 16
    batch = 8

    key = jax.random.PRNGKey(0)
    k_table, k_item, k_w, k_b, k_idx = jax.random.split(key, 5)

    # Deterministic "parameters" (stand-ins for the user_embeddings
    # ParameterDict and fc = nn.Linear(2*D, 1)).
    user_table = jax.random.normal(k_table, (num_users, embedding_dim), jnp.float32)
    fc_weight = jax.random.normal(k_w, (1, 2 * embedding_dim), jnp.float32) * 0.1
    fc_bias = jax.random.normal(k_b, (1,), jnp.float32) * 0.1

    # String user ids -> integer rows (Python glue; a missing id raises KeyError,
    # mirroring the PyTorch `user_exists` check/raise).
    user_ids = [f"user_{i}" for i in range(num_users)]
    id_to_row = {uid: i for i, uid in enumerate(user_ids)}
    batch_user_ids = [user_ids[int(i)] for i in
                      jax.random.randint(k_idx, (batch,), 0, num_users)]
    user_idx = jnp.array([id_to_row[uid] for uid in batch_user_ids], dtype=jnp.int32)

    item_emb = jax.random.normal(k_item, (batch, embedding_dim), jnp.float32)

    out = recommendation_forward(user_idx, user_table, item_emb, fc_weight, fc_bias)
    out = jax.block_until_ready(out)

    # Pure-JAX reference check.
    user_embs = user_table[user_idx]                                  # [B, D]
    combined = jnp.concatenate([user_embs, item_emb], axis=1)         # [B, 2D]
    ref = jax.nn.sigmoid(combined @ fc_weight.T + fc_bias)            # [B, 1]
    assert out.shape == (batch, 1)
    assert jnp.allclose(out, ref, atol=1e-5), (out, ref)

    print("KERNEL_OK")
</pallas_src>

<mosaic_0001>
module attributes {stable_mosaic.version = 11 : i64} {
  func.func @recommendation_kernel(%arg0: memref<8xi32, #tpu.memory_space<smem>>, %arg1: memref<16xf32, #tpu.memory_space<smem>>, %arg2: memref<1xf32, #tpu.memory_space<smem>>, %arg3: memref<8x32xf32, #tpu.memory_space<vmem>>, %arg4: memref<1x32xf32, #tpu.memory_space<vmem>>, %arg5: memref<8x1xf32, #tpu.memory_space<vmem>>) attributes {dimension_semantics = [], scalar_prefetch = 0 : i64, scratch_operands = 0 : i64, tpu.core_type = #tpu.core_type<tc>} {
    %c0 = arith.constant 0 : index
    %c0_0 = arith.constant 0 : index
    %0 = vector.load %arg3[%c0, %c0_0] : memref<8x32xf32, #tpu.memory_space<vmem>>, vector<8x32xf32>
    %c0_1 = arith.constant 0 : index
    %c0_2 = arith.constant 0 : index
    %1 = vector.load %arg4[%c0_1, %c0_2] : memref<1x32xf32, #tpu.memory_space<vmem>>, vector<1x32xf32>
    %2 = vector.broadcast %1 : vector<1x32xf32> to vector<8x32xf32>
    %3 = arith.mulf %0, %2 : vector<8x32xf32>
    %cst = arith.constant dense<0.000000e+00> : vector<8xf32>
    %4 = vector.multi_reduction <add>, %3, %cst [1] : vector<8x32xf32> to vector<8xf32>
    %5 = vector.shape_cast %4 : vector<8xf32> to vector<8x1xf32>
    %6 = tpu.iota {dimensions = array<i32: 0>} : vector<8x1xi32>
    %cst_3 = arith.constant 0.000000e+00 : f32
    %7 = vector.broadcast %cst_3 : f32 to vector<8x1xf32>
    %c0_4 = arith.constant 0 : index
    %8 = memref.load %arg0[%c0_4] : memref<8xi32, #tpu.memory_space<smem>>
    %9 = arith.index_cast %8 : i32 to index
    %10 = memref.load %arg1[%9] : memref<16xf32, #tpu.memory_space<smem>>
    %c0_i32 = arith.constant 0 : i32
    %11 = vector.broadcast %c0_i32 : i32 to vector<8x1xi32>
    %12 = arith.cmpi eq, %6, %11 : vector<8x1xi32>
    %13 = vector.broadcast %10 : f32 to vector<8x1xf32>
    %14 = arith.select %12, %13, %7 : vector<8x1xi1>, vector<8x1xf32>
    %c1 = arith.constant 1 : index
    %15 = memref.load %arg0[%c1] : memref<8xi32, #tpu.memory_space<smem>>
    %16 = arith.index_cast %15 : i32 to index
    %17 = memref.load %arg1[%16] : memref<16xf32, #tpu.memory_space<smem>>
    %c1_i32 = arith.constant 1 : i32
    %18 = vector.broadcast %c1_i32 : i32 to vector<8x1xi32>
    %19 = arith.cmpi eq, %6, %18 : vector<8x1xi32>
    %20 = vector.broadcast %17 : f32 to vector<8x1xf32>
    %21 = arith.select %19, %20, %14 : vector<8x1xi1>, vector<8x1xf32>
    %c2 = arith.constant 2 : index
    %22 = memref.load %arg0[%c2] : memref<8xi32, #tpu.memory_space<smem>>
    %23 = arith.index_cast %22 : i32 to index
    %24 = memref.load %arg1[%23] : memref<16xf32, #tpu.memory_space<smem>>
    %c2_i32 = arith.constant 2 : i32
    %25 = vector.broadcast %c2_i32 : i32 to vector<8x1xi32>
    %26 = arith.cmpi eq, %6, %25 : vector<8x1xi32>
    %27 = vector.broadcast %24 : f32 to vector<8x1xf32>
    %28 = arith.select %26, %27, %21 : vector<8x1xi1>, vector<8x1xf32>
    %c3 = arith.constant 3 : index
    %29 = memref.load %arg0[%c3] : memref<8xi32, #tpu.memory_space<smem>>
    %30 = arith.index_cast %29 : i32 to index
    %31 = memref.load %arg1[%30] : memref<16xf32, #tpu.memory_space<smem>>
    %c3_i32 = arith.constant 3 : i32
    %32 = vector.broadcast %c3_i32 : i32 to vector<8x1xi32>
    %33 = arith.cmpi eq, %6, %32 : vector<8x1xi32>
    %34 = vector.broadcast %31 : f32 to vector<8x1xf32>
    %35 = arith.select %33, %34, %28 : vector<8x1xi1>, vector<8x1xf32>
    %c4 = arith.constant 4 : index
    %36 = memref.load %arg0[%c4] : memref<8xi32, #tpu.memory_space<smem>>
    %37 = arith.index_cast %36 : i32 to index
    %38 = memref.load %arg1[%37] : memref<16xf32, #tpu.memory_space<smem>>
    %c4_i32 = arith.constant 4 : i32
    %39 = vector.broadcast %c4_i32 : i32 to vector<8x1xi32>
    %40 = arith.cmpi eq, %6, %39 : vector<8x1xi32>
    %41 = vector.broadcast %38 : f32 to vector<8x1xf32>
    %42 = arith.select %40, %41, %35 : vector<8x1xi1>, vector<8x1xf32>
    %c5 = arith.constant 5 : index
    %43 = memref.load %arg0[%c5] : memref<8xi32, #tpu.memory_space<smem>>
    %44 = arith.index_cast %43 : i32 to index
    %45 = memref.load %arg1[%44] : memref<16xf32, #tpu.memory_space<smem>>
    %c5_i32 = arith.constant 5 : i32
    %46 = vector.broadcast %c5_i32 : i32 to vector<8x1xi32>
    %47 = arith.cmpi eq, %6, %46 : vector<8x1xi32>
    %48 = vector.broadcast %45 : f32 to vector<8x1xf32>
    %49 = arith.select %47, %48, %42 : vector<8x1xi1>, vector<8x1xf32>
    %c6 = arith.constant 6 : index
    %50 = memref.load %arg0[%c6] : memref<8xi32, #tpu.memory_space<smem>>
    %51 = arith.index_cast %50 : i32 to index
    %52 = memref.load %arg1[%51] : memref<16xf32, #tpu.memory_space<smem>>
    %c6_i32 = arith.constant 6 : i32
    %53 = vector.broadcast %c6_i32 : i32 to vector<8x1xi32>
    %54 = arith.cmpi eq, %6, %53 : vector<8x1xi32>
    %55 = vector.broadcast %52 : f32 to vector<8x1xf32>
    %56 = arith.select %54, %55, %49 : vector<8x1xi1>, vector<8x1xf32>
    %c7 = arith.constant 7 : index
    %57 = memref.load %arg0[%c7] : memref<8xi32, #tpu.memory_space<smem>>
    %58 = arith.index_cast %57 : i32 to index
    %59 = memref.load %arg1[%58] : memref<16xf32, #tpu.memory_space<smem>>
    %c7_i32 = arith.constant 7 : i32
    %60 = vector.broadcast %c7_i32 : i32 to vector<8x1xi32>
    %61 = arith.cmpi eq, %6, %60 : vector<8x1xi32>
    %62 = vector.broadcast %59 : f32 to vector<8x1xf32>
    %63 = arith.select %61, %62, %56 : vector<8x1xi1>, vector<8x1xf32>
    %64 = arith.addf %5, %63 : vector<8x1xf32>
    %c0_5 = arith.constant 0 : index
    %65 = memref.load %arg2[%c0_5] : memref<1xf32, #tpu.memory_space<smem>>
    %66 = vector.broadcast %65 : f32 to vector<8x1xf32>
    %67 = arith.addf %64, %66 : vector<8x1xf32>
    %68 = arith.negf %67 : vector<8x1xf32>
    %69 = math.exp %68 : vector<8x1xf32>
    %cst_6 = arith.constant 1.000000e+00 : f32
    %70 = vector.broadcast %cst_6 : f32 to vector<8x1xf32>
    %71 = arith.addf %70, %69 : vector<8x1xf32>
    %72 = arith.divf %70, %71 : vector<8x1xf32>
    %c0_7 = arith.constant 0 : index
    %c0_8 = arith.constant 0 : index
    %73 = vector.load %arg5[%c0_7, %c0_8] : memref<8x1xf32, #tpu.memory_space<vmem>>, vector<8x1xf32>
    tpu.vector_store %arg5[%c0_7, %c0_8], %72 {strides = array<i32>} : memref<8x1xf32, #tpu.memory_space<vmem>>, vector<8x1xf32>,
    return
  }
}

</mosaic_0001>

<llo_original>
// kernel: tpu_custom_call.1
$region0: #{tpu_custom_call.1}
  #allocation0 [shape = 'u32[]', space=smem, size = 0x4, offset = 0x4, fixed_abs, tag = 'smem constant byte address 0x4 - core index']
  #allocation1 [shape = 'u32[144,128]{1,0:T(1,128)}', space=vmem, size = 0x12000, scoped, tag = 'internal scratch']
  #allocation2 [shape = 'f32[1]{0:T(128)S(6)}', space=smem, size = 0x200, scoped, tag = 'scoped memory for tpu_custom_call.1']
  %s0 = inlined_call_operand.vmem [shape: s32[8], index: 0, kind: input, shape index: {}]
  %s1 = inlined_call_operand.vmem [shape: f32[16], index: 1, kind: input, shape index: {}]
  %s2 = inlined_call_operand.<no memory space> [shape: f32[1], index: 2, kind: input, shape index: {}]
  %s3 = inlined_call_operand.vmem [shape: f32[8,32], index: 3, kind: input, shape index: {}]
  %s4 = inlined_call_operand.vmem [shape: f32[1,32], index: 4, kind: input, shape index: {}]
  %s5 = inlined_call_operand.vmem [shape: f32[8,1], index: 5, kind: output, shape index: {}]
  %s6 = sld [smem:[#allocation0]]
  $region38: #{tpu_custom_call.1} parent=0
    _
  %s8 = ssub.s32 1, %s6
  %s9 = scalar_select 0, %s8, %s6
  %10 = sst [smem:[#allocation2]] %s2
  $region1: #{tpu_custom_call.1} parent=0
    #allocation3 [shape = 'u8[512]{0}', space=smem, size = 0x200, scoped, tag = 'input window, operand 0, single buffered']
    #allocation4 [shape = 's32[1]{0}', space=sflag, size = 0x4, scoped, tag = 'scoped memory for tpu_custom_call.1']
    #allocation5 [shape = 'u8[512]{0}', space=smem, size = 0x200, scoped, tag = 'input window, operand 1, single buffered']
    #allocation6 [shape = 's32[1]{0}', space=sflag, size = 0x4, scoped, tag = 'scoped memory for tpu_custom_call.1']
    %11 = vsyncpa [#allocation4], 0
    %12 = vsyncpa [#allocation6], 0
    // Predicated region
    $region2: #{tpu_custom_call.1} parent=1 // pred_check
      _
    $region3: #{tpu_custom_call.1} parent=1 // pred_check_branch
      %14 = sbr.rel (0) target = $region5
    $region4: #{tpu_custom_call.1} parent=1 // pred_region
      %s16 = ssub.s32 16, 16
      %17 = vsyncadd [#allocation4], %s16
      %s19 = sshll.u32 %s0, 4
      %s20 = int_to_ptr.vmem [resolvable:$true] %s19
      %22 = dma.vmem_to_smem %s20, 16, [#allocation3], [#allocation4]
    $region5: #{tpu_custom_call.1} parent=1 // pred_fallthru
      _
    // Predicated region
    $region6: #{tpu_custom_call.1} parent=1 // pred_check
      _
    $region7: #{tpu_custom_call.1} parent=1 // pred_check_branch
      %24 = sbr.rel (0) target = $region9
    $region8: #{tpu_custom_call.1} parent=1 // pred_region
      %s26 = ssub.s32 16, 16
      %27 = vsyncadd [#allocation6], %s26
      %s29 = sshll.u32 %s1, 4
      %s30 = int_to_ptr.vmem [resolvable:$true] %s29
      %32 = dma.vmem_to_smem %s30, 16, [#allocation5], [#allocation6]
    $region9: #{tpu_custom_call.1} parent=1 // pred_fallthru
      _
    // Predicated region
    $region10: #{tpu_custom_call.1} parent=1 // pred_check
      _
    $region11: #{tpu_custom_call.1} parent=1 // pred_check_branch
      %34 = sbr.rel (0) target = $region13
    $region12: #{tpu_custom_call.1} parent=1 // pred_region
      _
    $region13: #{tpu_custom_call.1} parent=1 // pred_fallthru
      _
    // Predicated region
    $region14: #{tpu_custom_call.1} parent=1 // pred_check
      _
    $region15: #{tpu_custom_call.1} parent=1 // pred_check_branch
      %36 = sbr.rel (0) target = $region17
    $region16: #{tpu_custom_call.1} parent=1 // pred_region
      _
    $region17: #{tpu_custom_call.1} parent=1 // pred_fallthru
      _
    // Predicated region
    $region18: #{tpu_custom_call.1} parent=1 // pred_check
      _
    $region19: #{tpu_custom_call.1} parent=1 // pred_check_branch
      %38 = sbr.rel (0) target = $region21
    $region20: #{tpu_custom_call.1} parent=1 // pred_region
      _
    $region21: #{tpu_custom_call.1} parent=1 // pred_fallthru
      _
    // Predicated region
    $region22: #{tpu_custom_call.1} parent=1 // pred_check
      _
    $region23: #{tpu_custom_call.1} parent=1 // pred_check_branch
      %40 = sbr.rel (0) target = $region25
    $region24: #{tpu_custom_call.1} parent=1 // pred_region
      %41 = dma.done [#allocation4], 16
    $region25: #{tpu_custom_call.1} parent=1 // pred_fallthru
      _
    // Predicated region
    $region26: #{tpu_custom_call.1} parent=1 // pred_check
      _
    $region27: #{tpu_custom_call.1} parent=1 // pred_check_branch
      %43 = sbr.rel (0) target = $region29
    $region28: #{tpu_custom_call.1} parent=1 // pred_region
      %44 = dma.done [#allocation6], 16
    $region29: #{tpu_custom_call.1} parent=1 // pred_fallthru
      _
    %45 = sfence
    %v46 = vld [vmem:[%s3] sm:$0xff]
    %v47 = vld [vmem:[%s4] sm:$0x1]
    %v49 = vlaneseq
    %v50 = vshrl.u32 %v49, 7
    %v51 = vsub.s32 0, %v50
    %v52 = vrot.slane %v47, %v51
    %v54 = vmul.f32 %v46, %v52
    %vm55 = vcmask 261120
    %v56 = vsel %vm55, %v54, 0.0
    %57 = vadd.xlane.f32.xlu0 %v56
    %v58 = vpop.xlane.xlu0 %57
    %v59 = vlaneseq
    %v60 = vshrl.u32 %v59, 7
    %s61 = sld [smem:[#allocation3]]
    %s62 = sld [smem:[#allocation5 + %s61]]
    %vm63 = vcmp.eq.s32.totalorder %v60, 0
    %v64 = vstv %s62
    %v65 = vsel %vm63, %v64, 0.0
    %s66 = sld [smem:[#allocation3 + $0x1]]
    %s67 = sld [smem:[#allocation5 + %s66]]
    %vm68 = vcmp.eq.s32.totalorder %v60, 1
    %v69 = vstv %s67
    %v70 = vsel %vm68, %v69, %v65
    %s71 = sld [smem:[#allocation3 + $0x2]]
    %s72 = sld [smem:[#allocation5 + %s71]]
    %vm73 = vcmp.eq.s32.totalorder %v60, 2
    %v74 = vstv %s72
    %v75 = vsel %vm73, %v74, %v70
    %s76 = sld [smem:[#allocation3 + $0x3]]
    %s77 = sld [smem:[#allocation5 + %s76]]
    %vm78 = vcmp.eq.s32.totalorder %v60, 3
    %v79 = vstv %s77
    %v80 = vsel %vm78, %v79, %v75
    %s81 = sld [smem:[#allocation3 + $0x4]]
    %s82 = sld [smem:[#allocation5 + %s81]]
    %vm83 = vcmp.eq.s32.totalorder %v60, 4
    %v84 = vstv %s82
    %v85 = vsel %vm83, %v84, %v80
    %s86 = sld [smem:[#allocation3 + $0x5]]
    %s87 = sld [smem:[#allocation5 + %s86]]
    %vm88 = vcmp.eq.s32.totalorder %v60, 5
    %v89 = vstv %s87
    %v90 = vsel %vm88, %v89, %v85
    %s91 = sld [smem:[#allocation3 + $0x6]]
    %s92 = sld [smem:[#allocation5 + %s91]]
    %vm93 = vcmp.eq.s32.totalorder %v60, 6
    %v94 = vstv %s92
    %v95 = vsel %vm93, %v94, %v90
    %s96 = sld [smem:[#allocation3 + $0x7]]
    %s97 = sld [smem:[#allocation5 + %s96]]
    %vm98 = vcmp.eq.s32.totalorder %v60, 7
    %v99 = vstv %s97
    %v100 = vsel %vm98, %v99, %v95
    %v101 = vadd.f32 %v58, %v100
    %s102 = sld [smem:[#allocation2]]
    %v103 = vstv %s102
    %v104 = vadd.f32 %v101, %v103
    %v105 = vxor.u32 %v104, 2147483648
    %v106 = vmul.f32 %v105, 1.442695
    %v107 = vpow.pop %v106
    %v108 = vadd.f32 %v107, 1.0
    %v109 = vrcp.pop %v108
    %v110 = vmul.f32 1.0, %v109
    %vm111 = vcmask 7168
    %112 = vst.msk [vmem:[%s5] sm:$0xff] %vm111, %v110
    // Predicated region
    $region30: #{tpu_custom_call.1} parent=1 // pred_check
      _
    $region31: #{tpu_custom_call.1} parent=1 // pred_check_branch
      %114 = sbr.rel (0) target = $region33
    $region32: #{tpu_custom_call.1} parent=1 // pred_region
      _
    $region33: #{tpu_custom_call.1} parent=1 // pred_fallthru
      _
    // Predicated region
    $region34: #{tpu_custom_call.1} parent=1 // pred_check
      _
    $region35: #{tpu_custom_call.1} parent=1 // pred_check_branch
      %116 = sbr.rel (0) target = $region37
    $region36: #{tpu_custom_call.1} parent=1 // pred_region
      _
    $region37: #{tpu_custom_call.1} parent=1 // pred_fallthru
      _
    %117 = vsyncpa [#allocation4], 1
    %118 = vsyncpa [#allocation6], 1

</llo_original>
